<compile_context>
chip_gen: v7x
topology: tpu7x:2x2x1
jax: 0.10.0
libtpu: 0.0.40
codegen_flags: <defaults>
</compile_context>

<pallas_src>
import jax
import jax.numpy as jnp
from jax.experimental import pallas as pl
from jax.experimental.pallas import tpu as pltpu


def _make_conv3x3_sigmoid_kernel(C, H, W, G):
    seg = W + 2            # per-image lane segment (1-pixel zero border on each side)
    L = G * seg            # packed accumulator / output lane width
    # scratch has 2 extra always-zero trailing columns so the dj=1,2 slices stay in range
    # (those columns only feed the discarded junk lanes of the last segment)

    def kernel(x_ref, w_ref, o_ref, xp_ref):
        # x_ref : VMEM (G, C, H, W)   raw (unpadded) images of this group
        # w_ref : SMEM (C*9,)         conv weights, flat index = c*9 + di*3 + dj
        # o_ref : VMEM (1, H, L)      packed mask output (lane-dense store)
        # xp_ref: VMEM (C, H+2, L+2)  packed, zero-bordered staging scratch

        # --- stage: build the packed zero-padded planes in VMEM (no HBM pad round trip) ---
        # Re-zeroed every step (cheap VMEM-only pass) so the kernel is megacore-safe: no
        # init-once state that a second TensorCore's grid shard would miss.
        xp_ref[...] = jnp.zeros(xp_ref.shape, xp_ref.dtype)
        for b in range(G):                                   # static unroll, G kept small
            off = b * seg + 1
            xp_ref[:, 1:H + 1, off:off + W] = x_ref[b].astype(jnp.float32)

        # --- accumulate the 9 taps over channels (VPU formulation; Cout == 1 => MXU useless) ---
        def body(c, accs):
            a0, a1, a2 = accs
            base = c * 9
            # 3 lane-shifted plane loads per channel (dj hoisted out of the di loop);
            # the di taps are register row slices of each plane.
            s0 = xp_ref[c, :, 0:L]                           # dj = 0
            a0 = a0 + s0[0:H] * w_ref[base + 0]
            a0 = a0 + s0[1:H + 1] * w_ref[base + 3]
            a0 = a0 + s0[2:H + 2] * w_ref[base + 6]
            s1 = xp_ref[c, :, 1:1 + L]                       # dj = 1
            a1 = a1 + s1[0:H] * w_ref[base + 1]
            a1 = a1 + s1[1:H + 1] * w_ref[base + 4]
            a1 = a1 + s1[2:H + 2] * w_ref[base + 7]
            s2 = xp_ref[c, :, 2:2 + L]                       # dj = 2
            a2 = a2 + s2[0:H] * w_ref[base + 2]
            a2 = a2 + s2[1:H + 1] * w_ref[base + 5]
            a2 = a2 + s2[2:H + 2] * w_ref[base + 8]
            return a0, a1, a2

        zero = jnp.zeros((H, L), jnp.float32)
        a0, a1, a2 = jax.lax.fori_loop(0, C, body, (zero, zero, zero),
                                       unroll=(C if C <= 8 else 4))
        acc = (a0 + a1) + a2

        # --- fused sigmoid epilogue (exp on EUP; exact reciprocal keeps the 1e-4 tolerance) ---
        o_ref[0] = pl.reciprocal(1.0 + jnp.exp(-acc), approx=False)

    return kernel


def _choose_group_size(N, C, H, W):
    """Images packed side-by-side along the lane axis per grid step."""
    seg = W + 2
    img_bytes = C * H * W * 4
    g_lane = max(1, (128 + seg - 1) // seg)            # fill >= 128 lanes (lane density)
    g_dma = max(1, (2 * 1024 * 1024) // img_bytes)     # ~2 MiB input block per grid step
    g = min(N, max(g_lane, g_dma), 64)                 # 64: keep the static staging unroll sane
    if g == N and N > g_lane and N >= 2:               # keep >= 2 grid steps for megacore (v7x)
        g = max(g_lane, (N + 1) // 2)

    def acc_vregs(gg):                                  # 3 partial accumulators in vregs
        return 3 * ((H + 7) // 8) * ((gg * seg + 127) // 128)

    while g > 1 and acc_vregs(g) > 24:
        g -= 1

    def vmem_bytes(gg):                                 # double-buffered in/out + padded scratch
        lp = gg * seg + 2
        return 2 * gg * img_bytes + C * (H + 2) * lp * 4 + 2 * H * (lp - 2) * 4

    while g > 1 and vmem_bytes(g) > 12 * 1024 * 1024:
        g -= 1
    return g


def get_mask_forward(x, w):
    """GET_MASK forward: Sigmoid(Conv2d(ngf->1, k=3, s=1, p=1, bias=False)(x)).

    x: [N, ngf, H, W] float32 (NCHW, PyTorch layout)
    w: [1, ngf, 3, 3] float32 (PyTorch Conv2d weight layout)
    returns [N, 1, H, W] float32
    """
    N, C, H, W = x.shape
    assert w.shape == (1, C, 3, 3), w.shape

    G = _choose_group_size(N, C, H, W)       # images packed per grid step
    NG = (N + G - 1) // G                    # grid length (partial last group is discarded below)
    seg = W + 2
    L = G * seg

    w_flat = w[0].astype(jnp.float32).reshape(-1)        # [C*9], index = c*9 + di*3 + dj
    kernel = _make_conv3x3_sigmoid_kernel(C, H, W, G)

    out_packed = pl.pallas_call(
        kernel,
        out_shape=jax.ShapeDtypeStruct((NG, H, L), jnp.float32),
        grid=(NG,),
        in_specs=[
            pl.BlockSpec((G, C, H, W), lambda q: (q, 0, 0, 0)),
            pl.BlockSpec(memory_space=pltpu.MemorySpace.SMEM),
        ],
        out_specs=pl.BlockSpec((1, H, L), lambda q: (q, 0, 0)),
        scratch_shapes=[pltpu.VMEM((C, H + 2, L + 2), jnp.float32)],
        compiler_params=pltpu.CompilerParams(
            dimension_semantics=("parallel",),
            vmem_limit_bytes=32 * 1024 * 1024),
    )(x, w_flat)

    # Unpack the lane-packed slab: (NG, H, G*(W+2)) -> (N, 1, H, W).
    # This touches only the 1-channel output (the C-channel input never took a pad round trip).
    y = out_packed.reshape(NG, H, G, seg)
    y = jnp.transpose(y, (0, 2, 1, 3)).reshape(NG * G, H, seg)
    return y[:N, None, :, 0:W]


def _reference_get_mask(x, w):
    y = jax.lax.conv_general_dilated(
        x, w, window_strides=(1, 1), padding=((1, 1), (1, 1)),
        dimension_numbers=("NCHW", "OIHW", "NCHW"),
        precision=jax.lax.Precision.HIGHEST)
    return jax.nn.sigmoid(y)


if __name__ == "__main__":
    N, ngf, H, W = 2, 4, 16, 16
    key = jax.random.PRNGKey(0)
    kx, kw = jax.random.split(key)
    x = jax.random.normal(kx, (N, ngf, H, W), jnp.float32)
    bound = 1.0 / ((ngf * 9) ** 0.5)                       # PyTorch-style conv init range
    w = jax.random.uniform(kw, (1, ngf, 3, 3), jnp.float32, -bound, bound)

    fwd = jax.jit(get_mask_forward)
    y = jax.block_until_ready(fwd(x, w))

    assert y.shape == (N, 1, H, W), y.shape
    assert bool(jnp.all(jnp.isfinite(y)))

    y_ref = _reference_get_mask(x, w)
    assert bool(jnp.allclose(y, y_ref, atol=1e-4, rtol=1e-4)), \
        float(jnp.max(jnp.abs(y - y_ref)))

    print("KERNEL_OK")
</pallas_src>

<mosaic_0001>
module attributes {stable_mosaic.version = 11 : i64} {
  func.func @kernel(%arg0: i32, %arg1: memref<2x4x16x16xf32, #tpu.memory_space<vmem>>, %arg2: memref<36xf32, #tpu.memory_space<smem>>, %arg3: memref<1x16x36xf32, #tpu.memory_space<vmem>>, %arg4: memref<4x18x38xf32, #tpu.memory_space<vmem>>) attributes {dimension_semantics = [#tpu.dimension_semantics<parallel>], iteration_bounds = array<i64: 1>, scalar_prefetch = 0 : i64, scratch_operands = 1 : i64, tpu.core_type = #tpu.core_type<tc>, window_params = [{transform_indices = @transform_0, window_bounds = array<i64: 2, 4, 16, 16>}, {transform_indices = @transform_1, window_bounds = array<i64: 36>}, {transform_indices = @transform_2, window_bounds = array<i64: 1, 16, 36>}]} {
    %cst = arith.constant 0.000000e+00 : f32
    %0 = vector.broadcast %cst : f32 to vector<4x18x38xf32>
    %c0 = arith.constant 0 : index
    %c0_0 = arith.constant 0 : index
    %c0_1 = arith.constant 0 : index
    %1 = vector.load %arg4[%c0, %c0_0, %c0_1] : memref<4x18x38xf32, #tpu.memory_space<vmem>>, vector<4x18x38xf32>
    tpu.vector_store %arg4[%c0, %c0_0, %c0_1], %0 {strides = array<i32>} : memref<4x18x38xf32, #tpu.memory_space<vmem>>, vector<4x18x38xf32>,
    %c0_2 = arith.constant 0 : index
    %c0_3 = arith.constant 0 : index
    %c0_4 = arith.constant 0 : index
    %c0_5 = arith.constant 0 : index
    %2 = vector.load %arg1[%c0_2, %c0_3, %c0_4, %c0_5] : memref<2x4x16x16xf32, #tpu.memory_space<vmem>>, vector<1x4x16x16xf32>
    %3 = vector.shape_cast %2 : vector<1x4x16x16xf32> to vector<4x16x16xf32>
    %c0_6 = arith.constant 0 : index
    %c1 = arith.constant 1 : index
    %c1_7 = arith.constant 1 : index
    %4 = vector.load %arg4[%c0_6, %c1, %c1_7] : memref<4x18x38xf32, #tpu.memory_space<vmem>>, vector<4x16x16xf32>
    tpu.vector_store %arg4[%c0_6, %c1, %c1_7], %3 {strides = array<i32>} : memref<4x18x38xf32, #tpu.memory_space<vmem>>, vector<4x16x16xf32>,
    %c1_8 = arith.constant 1 : index
    %c0_9 = arith.constant 0 : index
    %c0_10 = arith.constant 0 : index
    %c0_11 = arith.constant 0 : index
    %5 = vector.load %arg1[%c1_8, %c0_9, %c0_10, %c0_11] : memref<2x4x16x16xf32, #tpu.memory_space<vmem>>, vector<1x4x16x16xf32>
    %6 = vector.shape_cast %5 : vector<1x4x16x16xf32> to vector<4x16x16xf32>
    %c0_12 = arith.constant 0 : index
    %c1_13 = arith.constant 1 : index
    %c19 = arith.constant 19 : index
    %7 = vector.load %arg4[%c0_12, %c1_13, %c19] : memref<4x18x38xf32, #tpu.memory_space<vmem>>, vector<4x16x16xf32>
    tpu.vector_store %arg4[%c0_12, %c1_13, %c19], %6 {strides = array<i32>} : memref<4x18x38xf32, #tpu.memory_space<vmem>>, vector<4x16x16xf32>,
    %cst_14 = arith.constant 0.000000e+00 : f32
    %8 = vector.broadcast %cst_14 : f32 to vector<16x36xf32>
    %c0_i32 = arith.constant 0 : i32
    %c9_i32 = arith.constant 9 : i32
    %9 = arith.muli %c0_i32, %c9_i32 : i32
    %10 = arith.index_cast %c0_i32 : i32 to index
    %c0_15 = arith.constant 0 : index
    %c0_16 = arith.constant 0 : index
    %11 = vector.load %arg4[%10, %c0_15, %c0_16] : memref<4x18x38xf32, #tpu.memory_space<vmem>>, vector<1x18x36xf32>
    %12 = vector.shape_cast %11 : vector<1x18x36xf32> to vector<18x36xf32>
    %13 = vector.extract_strided_slice %12 {offsets = [0, 0], sizes = [16, 36], strides = [1, 1]} : vector<18x36xf32> to vector<16x36xf32>
    %c0_i32_17 = arith.constant 0 : i32
    %14 = arith.addi %9, %c0_i32_17 : i32
    %15 = arith.index_cast %14 : i32 to index
    %16 = memref.load %arg2[%15] : memref<36xf32, #tpu.memory_space<smem>>
    %17 = vector.broadcast %16 : f32 to vector<16x36xf32>
    %18 = arith.mulf %13, %17 : vector<16x36xf32>
    %19 = arith.addf %8, %18 : vector<16x36xf32>
    %20 = vector.extract_strided_slice %12 {offsets = [1, 0], sizes = [16, 36], strides = [1, 1]} : vector<18x36xf32> to vector<16x36xf32>
    %c3_i32 = arith.constant 3 : i32
    %21 = arith.addi %9, %c3_i32 : i32
    %22 = arith.index_cast %21 : i32 to index
    %23 = memref.load %arg2[%22] : memref<36xf32, #tpu.memory_space<smem>>
    %24 = vector.broadcast %23 : f32 to vector<16x36xf32>
    %25 = arith.mulf %20, %24 : vector<16x36xf32>
    %26 = arith.addf %19, %25 : vector<16x36xf32>
    %27 = vector.extract_strided_slice %12 {offsets = [2, 0], sizes = [16, 36], strides = [1, 1]} : vector<18x36xf32> to vector<16x36xf32>
    %c6_i32 = arith.constant 6 : i32
    %28 = arith.addi %9, %c6_i32 : i32
    %29 = arith.index_cast %28 : i32 to index
    %30 = memref.load %arg2[%29] : memref<36xf32, #tpu.memory_space<smem>>
    %31 = vector.broadcast %30 : f32 to vector<16x36xf32>
    %32 = arith.mulf %27, %31 : vector<16x36xf32>
    %33 = arith.addf %26, %32 : vector<16x36xf32>
    %34 = arith.index_cast %c0_i32 : i32 to index
    %c0_18 = arith.constant 0 : index
    %c1_19 = arith.constant 1 : index
    %35 = vector.load %arg4[%34, %c0_18, %c1_19] : memref<4x18x38xf32, #tpu.memory_space<vmem>>, vector<1x18x36xf32>
    %36 = vector.shape_cast %35 : vector<1x18x36xf32> to vector<18x36xf32>
    %37 = vector.extract_strided_slice %36 {offsets = [0, 0], sizes = [16, 36], strides = [1, 1]} : vector<18x36xf32> to vector<16x36xf32>
    %c1_i32 = arith.constant 1 : i32
    %38 = arith.addi %9, %c1_i32 : i32
    %39 = arith.index_cast %38 : i32 to index
    %40 = memref.load %arg2[%39] : memref<36xf32, #tpu.memory_space<smem>>
    %41 = vector.broadcast %40 : f32 to vector<16x36xf32>
    %42 = arith.mulf %37, %41 : vector<16x36xf32>
    %43 = arith.addf %8, %42 : vector<16x36xf32>
    %44 = vector.extract_strided_slice %36 {offsets = [1, 0], sizes = [16, 36], strides = [1, 1]} : vector<18x36xf32> to vector<16x36xf32>
    %c4_i32 = arith.constant 4 : i32
    %45 = arith.addi %9, %c4_i32 : i32
    %46 = arith.index_cast %45 : i32 to index
    %47 = memref.load %arg2[%46] : memref<36xf32, #tpu.memory_space<smem>>
    %48 = vector.broadcast %47 : f32 to vector<16x36xf32>
    %49 = arith.mulf %44, %48 : vector<16x36xf32>
    %50 = arith.addf %43, %49 : vector<16x36xf32>
    %51 = vector.extract_strided_slice %36 {offsets = [2, 0], sizes = [16, 36], strides = [1, 1]} : vector<18x36xf32> to vector<16x36xf32>
    %c7_i32 = arith.constant 7 : i32
    %52 = arith.addi %9, %c7_i32 : i32
    %53 = arith.index_cast %52 : i32 to index
    %54 = memref.load %arg2[%53] : memref<36xf32, #tpu.memory_space<smem>>
    %55 = vector.broadcast %54 : f32 to vector<16x36xf32>
    %56 = arith.mulf %51, %55 : vector<16x36xf32>
    %57 = arith.addf %50, %56 : vector<16x36xf32>
    %58 = arith.index_cast %c0_i32 : i32 to index
    %c0_20 = arith.constant 0 : index
    %c2 = arith.constant 2 : index
    %59 = vector.load %arg4[%58, %c0_20, %c2] : memref<4x18x38xf32, #tpu.memory_space<vmem>>, vector<1x18x36xf32>
    %60 = vector.shape_cast %59 : vector<1x18x36xf32> to vector<18x36xf32>
    %61 = vector.extract_strided_slice %60 {offsets = [0, 0], sizes = [16, 36], strides = [1, 1]} : vector<18x36xf32> to vector<16x36xf32>
    %c2_i32 = arith.constant 2 : i32
    %62 = arith.addi %9, %c2_i32 : i32
    %63 = arith.index_cast %62 : i32 to index
    %64 = memref.load %arg2[%63] : memref<36xf32, #tpu.memory_space<smem>>
    %65 = vector.broadcast %64 : f32 to vector<16x36xf32>
    %66 = arith.mulf %61, %65 : vector<16x36xf32>
    %67 = arith.addf %8, %66 : vector<16x36xf32>
    %68 = vector.extract_strided_slice %60 {offsets = [1, 0], sizes = [16, 36], strides = [1, 1]} : vector<18x36xf32> to vector<16x36xf32>
    %c5_i32 = arith.constant 5 : i32
    %69 = arith.addi %9, %c5_i32 : i32
    %70 = arith.index_cast %69 : i32 to index
    %71 = memref.load %arg2[%70] : memref<36xf32, #tpu.memory_space<smem>>
    %72 = vector.broadcast %71 : f32 to vector<16x36xf32>
    %73 = arith.mulf %68, %72 : vector<16x36xf32>
    %74 = arith.addf %67, %73 : vector<16x36xf32>
    %75 = vector.extract_strided_slice %60 {offsets = [2, 0], sizes = [16, 36], strides = [1, 1]} : vector<18x36xf32> to vector<16x36xf32>
    %c8_i32 = arith.constant 8 : i32
    %76 = arith.addi %9, %c8_i32 : i32
    %77 = arith.index_cast %76 : i32 to index
    %78 = memref.load %arg2[%77] : memref<36xf32, #tpu.memory_space<smem>>
    %79 = vector.broadcast %78 : f32 to vector<16x36xf32>
    %80 = arith.mulf %75, %79 : vector<16x36xf32>
    %81 = arith.addf %74, %80 : vector<16x36xf32>
    %c1_i32_21 = arith.constant 1 : i32
    %c9_i32_22 = arith.constant 9 : i32
    %82 = arith.muli %c1_i32_21, %c9_i32_22 : i32
    %83 = arith.index_cast %c1_i32_21 : i32 to index
    %c0_23 = arith.constant 0 : index
    %c0_24 = arith.constant 0 : index
    %84 = vector.load %arg4[%83, %c0_23, %c0_24] : memref<4x18x38xf32, #tpu.memory_space<vmem>>, vector<1x18x36xf32>
    %85 = vector.shape_cast %84 : vector<1x18x36xf32> to vector<18x36xf32>
    %86 = vector.extract_strided_slice %85 {offsets = [0, 0], sizes = [16, 36], strides = [1, 1]} : vector<18x36xf32> to vector<16x36xf32>
    %c0_i32_25 = arith.constant 0 : i32
    %87 = arith.addi %82, %c0_i32_25 : i32
    %88 = arith.index_cast %87 : i32 to index
    %89 = memref.load %arg2[%88] : memref<36xf32, #tpu.memory_space<smem>>
    %90 = vector.broadcast %89 : f32 to vector<16x36xf32>
    %91 = arith.mulf %86, %90 : vector<16x36xf32>
    %92 = arith.addf %33, %91 : vector<16x36xf32>
    %93 = vector.extract_strided_slice %85 {offsets = [1, 0], sizes = [16, 36], strides = [1, 1]} : vector<18x36xf32> to vector<16x36xf32>
    %c3_i32_26 = arith.constant 3 : i32
    %94 = arith.addi %82, %c3_i32_26 : i32
    %95 = arith.index_cast %94 : i32 to index
    %96 = memref.load %arg2[%95] : memref<36xf32, #tpu.memory_space<smem>>
    %97 = vector.broadcast %96 : f32 to vector<16x36xf32>
    %98 = arith.mulf %93, %97 : vector<16x36xf32>
    %99 = arith.addf %92, %98 : vector<16x36xf32>
    %100 = vector.extract_strided_slice %85 {offsets = [2, 0], sizes = [16, 36], strides = [1, 1]} : vector<18x36xf32> to vector<16x36xf32>
    %c6_i32_27 = arith.constant 6 : i32
    %101 = arith.addi %82, %c6_i32_27 : i32
    %102 = arith.index_cast %101 : i32 to index
    %103 = memref.load %arg2[%102] : memref<36xf32, #tpu.memory_space<smem>>
    %104 = vector.broadcast %103 : f32 to vector<16x36xf32>
    %105 = arith.mulf %100, %104 : vector<16x36xf32>
    %106 = arith.addf %99, %105 : vector<16x36xf32>
    %107 = arith.index_cast %c1_i32_21 : i32 to index
    %c0_28 = arith.constant 0 : index
    %c1_29 = arith.constant 1 : index
    %108 = vector.load %arg4[%107, %c0_28, %c1_29] : memref<4x18x38xf32, #tpu.memory_space<vmem>>, vector<1x18x36xf32>
    %109 = vector.shape_cast %108 : vector<1x18x36xf32> to vector<18x36xf32>
    %110 = vector.extract_strided_slice %109 {offsets = [0, 0], sizes = [16, 36], strides = [1, 1]} : vector<18x36xf32> to vector<16x36xf32>
    %c1_i32_30 = arith.constant 1 : i32
    %111 = arith.addi %82, %c1_i32_30 : i32
    %112 = arith.index_cast %111 : i32 to index
    %113 = memref.load %arg2[%112] : memref<36xf32, #tpu.memory_space<smem>>
    %114 = vector.broadcast %113 : f32 to vector<16x36xf32>
    %115 = arith.mulf %110, %114 : vector<16x36xf32>
    %116 = arith.addf %57, %115 : vector<16x36xf32>
    %117 = vector.extract_strided_slice %109 {offsets = [1, 0], sizes = [16, 36], strides = [1, 1]} : vector<18x36xf32> to vector<16x36xf32>
    %c4_i32_31 = arith.constant 4 : i32
    %118 = arith.addi %82, %c4_i32_31 : i32
    %119 = arith.index_cast %118 : i32 to index
    %120 = memref.load %arg2[%119] : memref<36xf32, #tpu.memory_space<smem>>
    %121 = vector.broadcast %120 : f32 to vector<16x36xf32>
    %122 = arith.mulf %117, %121 : vector<16x36xf32>
    %123 = arith.addf %116, %122 : vector<16x36xf32>
    %124 = vector.extract_strided_slice %109 {offsets = [2, 0], sizes = [16, 36], strides = [1, 1]} : vector<18x36xf32> to vector<16x36xf32>
    %c7_i32_32 = arith.constant 7 : i32
    %125 = arith.addi %82, %c7_i32_32 : i32
    %126 = arith.index_cast %125 : i32 to index
    %127 = memref.load %arg2[%126] : memref<36xf32, #tpu.memory_space<smem>>
    %128 = vector.broadcast %127 : f32 to vector<16x36xf32>
    %129 = arith.mulf %124, %128 : vector<16x36xf32>
    %130 = arith.addf %123, %129 : vector<16x36xf32>
    %131 = arith.index_cast %c1_i32_21 : i32 to index
    %c0_33 = arith.constant 0 : index
    %c2_34 = arith.constant 2 : index
    %132 = vector.load %arg4[%131, %c0_33, %c2_34] : memref<4x18x38xf32, #tpu.memory_space<vmem>>, vector<1x18x36xf32>
    %133 = vector.shape_cast %132 : vector<1x18x36xf32> to vector<18x36xf32>
    %134 = vector.extract_strided_slice %133 {offsets = [0, 0], sizes = [16, 36], strides = [1, 1]} : vector<18x36xf32> to vector<16x36xf32>
    %c2_i32_35 = arith.constant 2 : i32
    %135 = arith.addi %82, %c2_i32_35 : i32
    %136 = arith.index_cast %135 : i32 to index
    %137 = memref.load %arg2[%136] : memref<36xf32, #tpu.memory_space<smem>>
    %138 = vector.broadcast %137 : f32 to vector<16x36xf32>
    %139 = arith.mulf %134, %138 : vector<16x36xf32>
    %140 = arith.addf %81, %139 : vector<16x36xf32>
    %141 = vector.extract_strided_slice %133 {offsets = [1, 0], sizes = [16, 36], strides = [1, 1]} : vector<18x36xf32> to vector<16x36xf32>
    %c5_i32_36 = arith.constant 5 : i32
    %142 = arith.addi %82, %c5_i32_36 : i32
    %143 = arith.index_cast %142 : i32 to index
    %144 = memref.load %arg2[%143] : memref<36xf32, #tpu.memory_space<smem>>
    %145 = vector.broadcast %144 : f32 to vector<16x36xf32>
    %146 = arith.mulf %141, %145 : vector<16x36xf32>
    %147 = arith.addf %140, %146 : vector<16x36xf32>
    %148 = vector.extract_strided_slice %133 {offsets = [2, 0], sizes = [16, 36], strides = [1, 1]} : vector<18x36xf32> to vector<16x36xf32>
    %c8_i32_37 = arith.constant 8 : i32
    %149 = arith.addi %82, %c8_i32_37 : i32
    %150 = arith.index_cast %149 : i32 to index
    %151 = memref.load %arg2[%150] : memref<36xf32, #tpu.memory_space<smem>>
    %152 = vector.broadcast %151 : f32 to vector<16x36xf32>
    %153 = arith.mulf %148, %152 : vector<16x36xf32>
    %154 = arith.addf %147, %153 : vector<16x36xf32>
    %c2_i32_38 = arith.constant 2 : i32
    %c9_i32_39 = arith.constant 9 : i32
    %155 = arith.muli %c2_i32_38, %c9_i32_39 : i32
    %156 = arith.index_cast %c2_i32_38 : i32 to index
    %c0_40 = arith.constant 0 : index
    %c0_41 = arith.constant 0 : index
    %157 = vector.load %arg4[%156, %c0_40, %c0_41] : memref<4x18x38xf32, #tpu.memory_space<vmem>>, vector<1x18x36xf32>
    %158 = vector.shape_cast %157 : vector<1x18x36xf32> to vector<18x36xf32>
    %159 = vector.extract_strided_slice %158 {offsets = [0, 0], sizes = [16, 36], strides = [1, 1]} : vector<18x36xf32> to vector<16x36xf32>
    %c0_i32_42 = arith.constant 0 : i32
    %160 = arith.addi %155, %c0_i32_42 : i32
    %161 = arith.index_cast %160 : i32 to index
    %162 = memref.load %arg2[%161] : memref<36xf32, #tpu.memory_space<smem>>
    %163 = vector.broadcast %162 : f32 to vector<16x36xf32>
    %164 = arith.mulf %159, %163 : vector<16x36xf32>
    %165 = arith.addf %106, %164 : vector<16x36xf32>
    %166 = vector.extract_strided_slice %158 {offsets = [1, 0], sizes = [16, 36], strides = [1, 1]} : vector<18x36xf32> to vector<16x36xf32>
    %c3_i32_43 = arith.constant 3 : i32
    %167 = arith.addi %155, %c3_i32_43 : i32
    %168 = arith.index_cast %167 : i32 to index
    %169 = memref.load %arg2[%168] : memref<36xf32, #tpu.memory_space<smem>>
    %170 = vector.broadcast %169 : f32 to vector<16x36xf32>
    %171 = arith.mulf %166, %170 : vector<16x36xf32>
    %172 = arith.addf %165, %171 : vector<16x36xf32>
    %173 = vector.extract_strided_slice %158 {offsets = [2, 0], sizes = [16, 36], strides = [1, 1]} : vector<18x36xf32> to vector<16x36xf32>
    %c6_i32_44 = arith.constant 6 : i32
    %174 = arith.addi %155, %c6_i32_44 : i32
    %175 = arith.index_cast %174 : i32 to index
    %176 = memref.load %arg2[%175] : memref<36xf32, #tpu.memory_space<smem>>
    %177 = vector.broadcast %176 : f32 to vector<16x36xf32>
    %178 = arith.mulf %173, %177 : vector<16x36xf32>
    %179 = arith.addf %172, %178 : vector<16x36xf32>
    %180 = arith.index_cast %c2_i32_38 : i32 to index
    %c0_45 = arith.constant 0 : index
    %c1_46 = arith.constant 1 : index
    %181 = vector.load %arg4[%180, %c0_45, %c1_46] : memref<4x18x38xf32, #tpu.memory_space<vmem>>, vector<1x18x36xf32>
    %182 = vector.shape_cast %181 : vector<1x18x36xf32> to vector<18x36xf32>
    %183 = vector.extract_strided_slice %182 {offsets = [0, 0], sizes = [16, 36], strides = [1, 1]} : vector<18x36xf32> to vector<16x36xf32>
    %c1_i32_47 = arith.constant 1 : i32
    %184 = arith.addi %155, %c1_i32_47 : i32
    %185 = arith.index_cast %184 : i32 to index
    %186 = memref.load %arg2[%185] : memref<36xf32, #tpu.memory_space<smem>>
    %187 = vector.broadcast %186 : f32 to vector<16x36xf32>
    %188 = arith.mulf %183, %187 : vector<16x36xf32>
    %189 = arith.addf %130, %188 : vector<16x36xf32>
    %190 = vector.extract_strided_slice %182 {offsets = [1, 0], sizes = [16, 36], strides = [1, 1]} : vector<18x36xf32> to vector<16x36xf32>
    %c4_i32_48 = arith.constant 4 : i32
    %191 = arith.addi %155, %c4_i32_48 : i32
    %192 = arith.index_cast %191 : i32 to index
    %193 = memref.load %arg2[%192] : memref<36xf32, #tpu.memory_space<smem>>
    %194 = vector.broadcast %193 : f32 to vector<16x36xf32>
    %195 = arith.mulf %190, %194 : vector<16x36xf32>
    %196 = arith.addf %189, %195 : vector<16x36xf32>
    %197 = vector.extract_strided_slice %182 {offsets = [2, 0], sizes = [16, 36], strides = [1, 1]} : vector<18x36xf32> to vector<16x36xf32>
    %c7_i32_49 = arith.constant 7 : i32
    %198 = arith.addi %155, %c7_i32_49 : i32
    %199 = arith.index_cast %198 : i32 to index
    %200 = memref.load %arg2[%199] : memref<36xf32, #tpu.memory_space<smem>>
    %201 = vector.broadcast %200 : f32 to vector<16x36xf32>
    %202 = arith.mulf %197, %201 : vector<16x36xf32>
    %203 = arith.addf %196, %202 : vector<16x36xf32>
    %204 = arith.index_cast %c2_i32_38 : i32 to index
    %c0_50 = arith.constant 0 : index
    %c2_51 = arith.constant 2 : index
    %205 = vector.load %arg4[%204, %c0_50, %c2_51] : memref<4x18x38xf32, #tpu.memory_space<vmem>>, vector<1x18x36xf32>
    %206 = vector.shape_cast %205 : vector<1x18x36xf32> to vector<18x36xf32>
    %207 = vector.extract_strided_slice %206 {offsets = [0, 0], sizes = [16, 36], strides = [1, 1]} : vector<18x36xf32> to vector<16x36xf32>
    %c2_i32_52 = arith.constant 2 : i32
    %208 = arith.addi %155, %c2_i32_52 : i32
    %209 = arith.index_cast %208 : i32 to index
    %210 = memref.load %arg2[%209] : memref<36xf32, #tpu.memory_space<smem>>
    %211 = vector.broadcast %210 : f32 to vector<16x36xf32>
    %212 = arith.mulf %207, %211 : vector<16x36xf32>
    %213 = arith.addf %154, %212 : vector<16x36xf32>
    %214 = vector.extract_strided_slice %206 {offsets = [1, 0], sizes = [16, 36], strides = [1, 1]} : vector<18x36xf32> to vector<16x36xf32>
    %c5_i32_53 = arith.constant 5 : i32
    %215 = arith.addi %155, %c5_i32_53 : i32
    %216 = arith.index_cast %215 : i32 to index
    %217 = memref.load %arg2[%216] : memref<36xf32, #tpu.memory_space<smem>>
    %218 = vector.broadcast %217 : f32 to vector<16x36xf32>
    %219 = arith.mulf %214, %218 : vector<16x36xf32>
    %220 = arith.addf %213, %219 : vector<16x36xf32>
    %221 = vector.extract_strided_slice %206 {offsets = [2, 0], sizes = [16, 36], strides = [1, 1]} : vector<18x36xf32> to vector<16x36xf32>
    %c8_i32_54 = arith.constant 8 : i32
    %222 = arith.addi %155, %c8_i32_54 : i32
    %223 = arith.index_cast %222 : i32 to index
    %224 = memref.load %arg2[%223] : memref<36xf32, #tpu.memory_space<smem>>
    %225 = vector.broadcast %224 : f32 to vector<16x36xf32>
    %226 = arith.mulf %221, %225 : vector<16x36xf32>
    %227 = arith.addf %220, %226 : vector<16x36xf32>
    %c3_i32_55 = arith.constant 3 : i32
    %c9_i32_56 = arith.constant 9 : i32
    %228 = arith.muli %c3_i32_55, %c9_i32_56 : i32
    %229 = arith.index_cast %c3_i32_55 : i32 to index
    %c0_57 = arith.constant 0 : index
    %c0_58 = arith.constant 0 : index
    %230 = vector.load %arg4[%229, %c0_57, %c0_58] : memref<4x18x38xf32, #tpu.memory_space<vmem>>, vector<1x18x36xf32>
    %231 = vector.shape_cast %230 : vector<1x18x36xf32> to vector<18x36xf32>
    %232 = vector.extract_strided_slice %231 {offsets = [0, 0], sizes = [16, 36], strides = [1, 1]} : vector<18x36xf32> to vector<16x36xf32>
    %c0_i32_59 = arith.constant 0 : i32
    %233 = arith.addi %228, %c0_i32_59 : i32
    %234 = arith.index_cast %233 : i32 to index
    %235 = memref.load %arg2[%234] : memref<36xf32, #tpu.memory_space<smem>>
    %236 = vector.broadcast %235 : f32 to vector<16x36xf32>
    %237 = arith.mulf %232, %236 : vector<16x36xf32>
    %238 = arith.addf %179, %237 : vector<16x36xf32>
    %239 = vector.extract_strided_slice %231 {offsets = [1, 0], sizes = [16, 36], strides = [1, 1]} : vector<18x36xf32> to vector<16x36xf32>
    %c3_i32_60 = arith.constant 3 : i32
    %240 = arith.addi %228, %c3_i32_60 : i32
    %241 = arith.index_cast %240 : i32 to index
    %242 = memref.load %arg2[%241] : memref<36xf32, #tpu.memory_space<smem>>
    %243 = vector.broadcast %242 : f32 to vector<16x36xf32>
    %244 = arith.mulf %239, %243 : vector<16x36xf32>
    %245 = arith.addf %238, %244 : vector<16x36xf32>
    %246 = vector.extract_strided_slice %231 {offsets = [2, 0], sizes = [16, 36], strides = [1, 1]} : vector<18x36xf32> to vector<16x36xf32>
    %c6_i32_61 = arith.constant 6 : i32
    %247 = arith.addi %228, %c6_i32_61 : i32
    %248 = arith.index_cast %247 : i32 to index
    %249 = memref.load %arg2[%248] : memref<36xf32, #tpu.memory_space<smem>>
    %250 = vector.broadcast %249 : f32 to vector<16x36xf32>
    %251 = arith.mulf %246, %250 : vector<16x36xf32>
    %252 = arith.addf %245, %251 : vector<16x36xf32>
    %253 = arith.index_cast %c3_i32_55 : i32 to index
    %c0_62 = arith.constant 0 : index
    %c1_63 = arith.constant 1 : index
    %254 = vector.load %arg4[%253, %c0_62, %c1_63] : memref<4x18x38xf32, #tpu.memory_space<vmem>>, vector<1x18x36xf32>
    %255 = vector.shape_cast %254 : vector<1x18x36xf32> to vector<18x36xf32>
    %256 = vector.extract_strided_slice %255 {offsets = [0, 0], sizes = [16, 36], strides = [1, 1]} : vector<18x36xf32> to vector<16x36xf32>
    %c1_i32_64 = arith.constant 1 : i32
    %257 = arith.addi %228, %c1_i32_64 : i32
    %258 = arith.index_cast %257 : i32 to index
    %259 = memref.load %arg2[%258] : memref<36xf32, #tpu.memory_space<smem>>
    %260 = vector.broadcast %259 : f32 to vector<16x36xf32>
    %261 = arith.mulf %256, %260 : vector<16x36xf32>
    %262 = arith.addf %203, %261 : vector<16x36xf32>
    %263 = vector.extract_strided_slice %255 {offsets = [1, 0], sizes = [16, 36], strides = [1, 1]} : vector<18x36xf32> to vector<16x36xf32>
    %c4_i32_65 = arith.constant 4 : i32
    %264 = arith.addi %228, %c4_i32_65 : i32
    %265 = arith.index_cast %264 : i32 to index
    %266 = memref.load %arg2[%265] : memref<36xf32, #tpu.memory_space<smem>>
    %267 = vector.broadcast %266 : f32 to vector<16x36xf32>
    %268 = arith.mulf %263, %267 : vector<16x36xf32>
    %269 = arith.addf %262, %268 : vector<16x36xf32>
    %270 = vector.extract_strided_slice %255 {offsets = [2, 0], sizes = [16, 36], strides = [1, 1]} : vector<18x36xf32> to vector<16x36xf32>
    %c7_i32_66 = arith.constant 7 : i32
    %271 = arith.addi %228, %c7_i32_66 : i32
    %272 = arith.index_cast %271 : i32 to index
    %273 = memref.load %arg2[%272] : memref<36xf32, #tpu.memory_space<smem>>
    %274 = vector.broadcast %273 : f32 to vector<16x36xf32>
    %275 = arith.mulf %270, %274 : vector<16x36xf32>
    %276 = arith.addf %269, %275 : vector<16x36xf32>
    %277 = arith.index_cast %c3_i32_55 : i32 to index
    %c0_67 = arith.constant 0 : index
    %c2_68 = arith.constant 2 : index
    %278 = vector.load %arg4[%277, %c0_67, %c2_68] : memref<4x18x38xf32, #tpu.memory_space<vmem>>, vector<1x18x36xf32>
    %279 = vector.shape_cast %278 : vector<1x18x36xf32> to vector<18x36xf32>
    %280 = vector.extract_strided_slice %279 {offsets = [0, 0], sizes = [16, 36], strides = [1, 1]} : vector<18x36xf32> to vector<16x36xf32>
    %c2_i32_69 = arith.constant 2 : i32
    %281 = arith.addi %228, %c2_i32_69 : i32
    %282 = arith.index_cast %281 : i32 to index
    %283 = memref.load %arg2[%282] : memref<36xf32, #tpu.memory_space<smem>>
    %284 = vector.broadcast %283 : f32 to vector<16x36xf32>
    %285 = arith.mulf %280, %284 : vector<16x36xf32>
    %286 = arith.addf %227, %285 : vector<16x36xf32>
    %287 = vector.extract_strided_slice %279 {offsets = [1, 0], sizes = [16, 36], strides = [1, 1]} : vector<18x36xf32> to vector<16x36xf32>
    %c5_i32_70 = arith.constant 5 : i32
    %288 = arith.addi %228, %c5_i32_70 : i32
    %289 = arith.index_cast %288 : i32 to index
    %290 = memref.load %arg2[%289] : memref<36xf32, #tpu.memory_space<smem>>
    %291 = vector.broadcast %290 : f32 to vector<16x36xf32>
    %292 = arith.mulf %287, %291 : vector<16x36xf32>
    %293 = arith.addf %286, %292 : vector<16x36xf32>
    %294 = vector.extract_strided_slice %279 {offsets = [2, 0], sizes = [16, 36], strides = [1, 1]} : vector<18x36xf32> to vector<16x36xf32>
    %c8_i32_71 = arith.constant 8 : i32
    %295 = arith.addi %228, %c8_i32_71 : i32
    %296 = arith.index_cast %295 : i32 to index
    %297 = memref.load %arg2[%296] : memref<36xf32, #tpu.memory_space<smem>>
    %298 = vector.broadcast %297 : f32 to vector<16x36xf32>
    %299 = arith.mulf %294, %298 : vector<16x36xf32>
    %300 = arith.addf %293, %299 : vector<16x36xf32>
    %c4_i32_72 = arith.constant 4 : i32
    %301 = arith.addf %252, %276 : vector<16x36xf32>
    %302 = arith.addf %301, %300 : vector<16x36xf32>
    %cst_73 = arith.constant 0.000000e+00 : f32
    %303 = vector.broadcast %cst_73 : f32 to vector<16x36xf32>
    %304 = arith.subf %303, %302 : vector<16x36xf32>
    %305 = math.exp %304 : vector<16x36xf32>
    %cst_74 = arith.constant 1.000000e+00 : f32
    %306 = vector.broadcast %cst_74 : f32 to vector<16x36xf32>
    %307 = arith.addf %306, %305 : vector<16x36xf32>
    %308 = tpu.reciprocal %307 : vector<16x36xf32> -> vector<16x36xf32>
    %c0_75 = arith.constant 0 : index
    %c0_76 = arith.constant 0 : index
    %c0_77 = arith.constant 0 : index
    %309 = vector.load %arg3[%c0_75, %c0_76, %c0_77] : memref<1x16x36xf32, #tpu.memory_space<vmem>>, vector<1x16x36xf32>
    %310 = vector.shape_cast %309 : vector<1x16x36xf32> to vector<16x36xf32>
    %311 = vector.shape_cast %308 : vector<16x36xf32> to vector<1x16x36xf32>
    tpu.vector_store %arg3[%c0_75, %c0_76, %c0_77], %311 {strides = array<i32>} : memref<1x16x36xf32, #tpu.memory_space<vmem>>, vector<1x16x36xf32>,
    return
  }
  func.func @transform_0(%arg0: i32) -> (i32, i32, i32, i32) {
    %c0_i32 = arith.constant 0 : i32
    %c0_i32_0 = arith.constant 0 : i32
    %c0_i32_1 = arith.constant 0 : i32
    %c0_i32_2 = arith.constant 0 : i32
    return %arg0, %c0_i32, %c0_i32_0, %c0_i32_1 : i32, i32, i32, i32
  }
  func.func @transform_1(%arg0: i32) -> i32 {
    %c0_i32 = arith.constant 0 : i32
    %c0_i32_0 = arith.constant 0 : i32
    return %c0_i32 : i32
  }
  func.func @transform_2(%arg0: i32) -> (i32, i32, i32) {
    %c0_i32 = arith.constant 0 : i32
    %c0_i32_0 = arith.constant 0 : i32
    %c0_i32_1 = arith.constant 0 : i32
    return %arg0, %c0_i32, %c0_i32_0 : i32, i32, i32
  }
}

</mosaic_0001>

<llo_original>
// kernel: squeeze.1
$region0: #{squeeze.1}
  %s0 = inlined_call_operand.vmem [shape: f32[1,4,3,3], index: 0, kind: input, shape index: {}]
  %s1 = inlined_call_operand.vmem [shape: f32[36], index: 1, kind: output, shape index: {}]
  $region1: #{squeeze.1} parent=0
    #allocation0 [shape = 'u8[4096]{0}', space=vmem, size = 0x1000, scoped, tag = 'scoped mem for output reshape']
    #allocation1 [shape = 'u8[16384]{0}', space=vmem, size = 0x4000, scoped, tag = 'scoped mem for input reshape']
    %s3 = sshllo.u32 0, 4
    %s4 = smul.addr 4, 3
    %s5 = scalar_lea.vmem %s0, %s4
    %v6 = vld [vmem:[%s5] sm:%s3]
    %s7 = scalar_lea.vmem [#allocation1], 24
    %8 = vst [vmem:[%s7] sm:%s3] %v6
    %s9 = smul.addr 4, 2
    %s10 = scalar_lea.vmem %s0, %s9
    %v11 = vld [vmem:[%s10] sm:%s3]
    %s12 = scalar_lea.vmem [#allocation1], 16
    %13 = vst [vmem:[%s12] sm:%s3] %v11
    %s14 = scalar_lea.vmem %s0, 4
    %v15 = vld [vmem:[%s14] sm:%s3]
    %s16 = scalar_lea.vmem [#allocation1], 8
    %17 = vst [vmem:[%s16] sm:%s3] %v15
    %v18 = vld [vmem:[%s0] sm:%s3]
    %19 = vst [vmem:[#allocation1] sm:%s3] %v18
    %v20 = vld [vmem:[#allocation1] sm:$0x1]
    %vm21 = vcmask 23552
    %22 = vst.msk [vmem:[#allocation0] sm:$0x1] %vm21, %v20
    %s23 = scalar_lea.vmem [#allocation1], 26
    %v24 = vld [vmem:[%s23] sm:$0x1]
    %25 = vrot.lane.b32.xlu0 %v24, 33
    %v26 = vpop.permute.xlu0 %25
    %vm27 = vcmask 294152
    %28 = vst.msk [vmem:[#allocation0] sm:$0x1] %vm27, %v26
    %s29 = scalar_lea.vmem [#allocation1], 25
    %v30 = vld [vmem:[%s29] sm:$0x1]
    %31 = vrot.lane.b32.xlu0 %v30, 30
    %v32 = vpop.permute.xlu0 %31
    %vm33 = vcmask 269552
    %34 = vst.msk [vmem:[#allocation0] sm:$0x1] %vm33, %v32
    %s35 = scalar_lea.vmem [#allocation1], 24
    %v36 = vld [vmem:[%s35] sm:$0x1]
    %37 = vrot.lane.b32.xlu0 %v36, 27
    %v38 = vpop.permute.xlu0 %37
    %vm39 = vcmask 244952
    %40 = vst.msk [vmem:[#allocation0] sm:$0x1] %vm39, %v38
    %s41 = scalar_lea.vmem [#allocation1], 18
    %v42 = vld [vmem:[%s41] sm:$0x1]
    %43 = vrot.lane.b32.xlu0 %v42, 24
    %v44 = vpop.permute.xlu0 %43
    %vm45 = vcmask 220352
    %46 = vst.msk [vmem:[#allocation0] sm:$0x1] %vm45, %v44
    %s47 = scalar_lea.vmem [#allocation1], 17
    %v48 = vld [vmem:[%s47] sm:$0x1]
    %49 = vrot.lane.b32.xlu0 %v48, 21
    %v50 = vpop.permute.xlu0 %49
    %vm51 = vcmask 195752
    %52 = vst.msk [vmem:[#allocation0] sm:$0x1] %vm51, %v50
    %s53 = scalar_lea.vmem [#allocation1], 16
    %v54 = vld [vmem:[%s53] sm:$0x1]
    %55 = vrot.lane.b32.xlu0 %v54, 18
    %v56 = vpop.permute.xlu0 %55
    %vm57 = vcmask 171152
    %58 = vst.msk [vmem:[#allocation0] sm:$0x1] %vm57, %v56
    %s59 = scalar_lea.vmem [#allocation1], 10
    %v60 = vld [vmem:[%s59] sm:$0x1]
    %61 = vrot.lane.b32.xlu0 %v60, 15
    %v62 = vpop.permute.xlu0 %61
    %vm63 = vcmask 146552
    %64 = vst.msk [vmem:[#allocation0] sm:$0x1] %vm63, %v62
    %s65 = scalar_lea.vmem [#allocation1], 9
    %v66 = vld [vmem:[%s65] sm:$0x1]
    %67 = vrot.lane.b32.xlu0 %v66, 12
    %v68 = vpop.permute.xlu0 %67
    %vm69 = vcmask 121952
    %70 = vst.msk [vmem:[#allocation0] sm:$0x1] %vm69, %v68
    %s71 = scalar_lea.vmem [#allocation1], 8
    %v72 = vld [vmem:[%s71] sm:$0x1]
    %73 = vrot.lane.b32.xlu0 %v72, 9
    %v74 = vpop.permute.xlu0 %73
    %vm75 = vcmask 97352
    %76 = vst.msk [vmem:[#allocation0] sm:$0x1] %vm75, %v74
    %s77 = scalar_lea.vmem [#allocation1], 2
    %v78 = vld [vmem:[%s77] sm:$0x1]
    %79 = vrot.lane.b32.xlu0 %v78, 6
    %v80 = vpop.permute.xlu0 %79
    %vm81 = vcmask 72752
    %82 = vst.msk [vmem:[#allocation0] sm:$0x1] %vm81, %v80
    %s83 = scalar_lea.vmem [#allocation1], 1
    %v84 = vld [vmem:[%s83] sm:$0x1]
    %85 = vrot.lane.b32.xlu0 %v84, 3
    %v86 = vpop.permute.xlu0 %85
    %vm87 = vcmask 48152
    %88 = vst.msk [vmem:[#allocation0] sm:$0x1] %vm87, %v86
    %s90 = sshllo.u32 0, 1
    %v92 = vld [vmem:[#allocation0] sm:%s90]
    %s93 = sshllo.u32 0, 1
    %94 = vst [vmem:[%s1] sm:%s93] %v92

// kernel: get_mask_forward.1
$region0: #{get_mask_forward.1}
  #allocation0 [shape = 'u32[]', space=smem, size = 0x4, offset = 0x4, fixed_abs, tag = 'smem constant byte address 0x4 - core index']
  #allocation1 [shape = 'u32[144,128]{1,0:T(1,128)}', space=vmem, size = 0x12000, scoped, tag = 'internal scratch']
  #allocation2 [shape = 'f32[4,18,38]{2,1,0:T(8,128)}', space=vmem, size = 0xc000, scoped, tag = 'scratch operand']
  %s0 = inlined_call_operand.hbm [shape: f32[2,4,16,16], index: 0, kind: input, shape index: {}]
  %s1 = inlined_call_operand.vmem [shape: f32[36], index: 1, kind: input, shape index: {}]
  %s2 = inlined_call_operand.vmem [shape: f32[1,16,36], index: 2, kind: output, shape index: {}]
  %s3 = sld [smem:[#allocation0]]
  $region26: #{get_mask_forward.1} parent=0
    _
  %s5 = ssub.s32 1, %s3
  %s6 = scalar_select 0, %s5, %s3
  $region1: #{get_mask_forward.1} parent=0
    #allocation3 [shape = 'u8[65536]{0}', space=vmem, size = 0x10000, scoped, tag = 'input window, operand 0, single buffered']
    #allocation4 [shape = 's32[1]{0}', space=sflag, size = 0x4, scoped, tag = 'scoped memory for get_mask_forward.1']
    #allocation5 [shape = 's32[1]{0}', space=sflag, size = 0x4, scoped, tag = 'scoped memory for get_mask_forward.1']
    #allocation6 [shape = 'u8[512]{0}', space=smem, size = 0x200, scoped, tag = 'input window, operand 1, single buffered']
    %7 = vsyncpa [#allocation4], 0
    %8 = vsyncpa [#allocation5], 0
    // Predicated region
    $region2: #{get_mask_forward.1} parent=1 // pred_check
      _
    $region3: #{get_mask_forward.1} parent=1 // pred_check_branch
      %10 = sbr.rel (0) target = $region5
    $region4: #{get_mask_forward.1} parent=1 // pred_region
      %s12 = ssub.s32 2048, 2048
      %13 = vsyncadd [#allocation4], %s12
      %s14 = sshll.u32 [#allocation3], 4
      %s15 = int_to_ptr.vmem [resolvable:$true] %s14
      %20 = dma.hbm_to_vmem [thread:$0]  %s0, 2048, %s15, [#allocation4], 128, 128, 8
    $region5: #{get_mask_forward.1} parent=1 // pred_fallthru
      _
    // Predicated region
    $region6: #{get_mask_forward.1} parent=1 // pred_check
      _
    $region7: #{get_mask_forward.1} parent=1 // pred_check_branch
      %22 = sbr.rel (0) target = $region9
    $region8: #{get_mask_forward.1} parent=1 // pred_region
      %s24 = ssub.s32 16, 16
      %25 = vsyncadd [#allocation5], %s24
      %s27 = sshll.u32 %s1, 4
      %s28 = int_to_ptr.vmem [resolvable:$true] %s27
      %30 = dma.vmem_to_smem %s28, 16, [#allocation6], [#allocation5]
    $region9: #{get_mask_forward.1} parent=1 // pred_fallthru
      _
    // Predicated region
    $region10: #{get_mask_forward.1} parent=1 // pred_check
      _
    $region11: #{get_mask_forward.1} parent=1 // pred_check_branch
      %32 = sbr.rel (0) target = $region13
    $region12: #{get_mask_forward.1} parent=1 // pred_region
      %33 = dma.done [#allocation4], 2048
    $region13: #{get_mask_forward.1} parent=1 // pred_fallthru
      _
    // Predicated region
    $region14: #{get_mask_forward.1} parent=1 // pred_check
      _
    $region15: #{get_mask_forward.1} parent=1 // pred_check_branch
      %35 = sbr.rel (0) target = $region17
    $region16: #{get_mask_forward.1} parent=1 // pred_region
      %36 = dma.done [#allocation5], 16
    $region17: #{get_mask_forward.1} parent=1 // pred_fallthru
      _
    %37 = sfence
    %vm38 = vcmask 310272
    %39 = vst.msk [vmem:[#allocation2] sm:$0xff] %vm38, 0.0
    %40 = vst.msk [vmem:[#allocation2 + $0x8] sm:$0xff] %vm38, 0.0
    %vm41 = vcmask 304128
    %42 = vst.msk [vmem:[#allocation2 + $0x10] sm:$0x3] %vm41, 0.0
    %43 = vst.msk [vmem:[#allocation2 + $0x18] sm:$0xff] %vm38, 0.0
    %44 = vst.msk [vmem:[#allocation2 + $0x20] sm:$0xff] %vm38, 0.0
    %45 = vst.msk [vmem:[#allocation2 + $0x28] sm:$0x3] %vm41, 0.0
    %46 = vst.msk [vmem:[#allocation2 + $0x30] sm:$0xff] %vm38, 0.0
    %47 = vst.msk [vmem:[#allocation2 + $0x38] sm:$0xff] %vm38, 0.0
    %48 = vst.msk [vmem:[#allocation2 + $0x40] sm:$0x3] %vm41, 0.0
    %49 = vst.msk [vmem:[#allocation2 + $0x48] sm:$0xff] %vm38, 0.0
    %50 = vst.msk [vmem:[#allocation2 + $0x50] sm:$0xff] %vm38, 0.0
    %51 = vst.msk [vmem:[#allocation2 + $0x58] sm:$0x3] %vm41, 0.0
    %v52 = vld [vmem:[#allocation3] sm:$0xff]
    %v53 = vld [vmem:[#allocation3 + $0x8] sm:$0xff]
    %v54 = vld [vmem:[#allocation3 + $0x10] sm:$0xff]
    %v55 = vld [vmem:[#allocation3 + $0x18] sm:$0xff]
    %v56 = vld [vmem:[#allocation3 + $0x20] sm:$0xff]
    %v57 = vld [vmem:[#allocation3 + $0x28] sm:$0xff]
    %v58 = vld [vmem:[#allocation3 + $0x30] sm:$0xff]
    %v59 = vld [vmem:[#allocation3 + $0x38] sm:$0xff]
    %68 = vrot.lane.b32.xlu0 %v52, 1
    %v69 = vpop.permute.xlu0 %68
    %70 = vrot.lane.b32.xlu0 %v53, 1
    %v71 = vpop.permute.xlu0 %70
    %72 = vrot.lane.b32.xlu0 %v54, 1
    %v73 = vpop.permute.xlu0 %72
    %74 = vrot.lane.b32.xlu0 %v55, 1
    %v75 = vpop.permute.xlu0 %74
    %76 = vrot.lane.b32.xlu0 %v56, 1
    %v77 = vpop.permute.xlu0 %76
    %78 = vrot.lane.b32.xlu0 %v57, 1
    %v79 = vpop.permute.xlu0 %78
    %80 = vrot.lane.b32.xlu0 %v58, 1
    %v81 = vpop.permute.xlu0 %80
    %82 = vrot.lane.b32.xlu0 %v59, 1
    %v83 = vpop.permute.xlu0 %82
    %vm92 = vcmask 138248
    %93 = vst.msk [vmem:[#allocation2 + $0x1] sm:$0xff] %vm92, %v69
    %94 = vst.msk [vmem:[#allocation2 + $0x9] sm:$0xff] %vm92, %v71
    %95 = vst.msk [vmem:[#allocation2 + $0x19] sm:$0xff] %vm92, %v73
    %96 = vst.msk [vmem:[#allocation2 + $0x21] sm:$0xff] %vm92, %v75
    %97 = vst.msk [vmem:[#allocation2 + $0x31] sm:$0xff] %vm92, %v77
    %98 = vst.msk [vmem:[#allocation2 + $0x39] sm:$0xff] %vm92, %v79
    %99 = vst.msk [vmem:[#allocation2 + $0x49] sm:$0xff] %vm92, %v81
    %100 = vst.msk [vmem:[#allocation2 + $0x51] sm:$0xff] %vm92, %v83
    %s101 = scalar_lea.vmem [#allocation3], 64
    %v102 = vld [vmem:[%s101] sm:$0xff]
    %v103 = vld [vmem:[%s101 + $0x8] sm:$0xff]
    %v104 = vld [vmem:[%s101 + $0x10] sm:$0xff]
    %v105 = vld [vmem:[%s101 + $0x18] sm:$0xff]
    %v106 = vld [vmem:[%s101 + $0x20] sm:$0xff]
    %v107 = vld [vmem:[%s101 + $0x28] sm:$0xff]
    %v108 = vld [vmem:[%s101 + $0x30] sm:$0xff]
    %v109 = vld [vmem:[%s101 + $0x38] sm:$0xff]
    %118 = vrot.lane.b32.xlu0 %v102, 19
    %v119 = vpop.permute.xlu0 %118
    %120 = vrot.lane.b32.xlu0 %v103, 19
    %v121 = vpop.permute.xlu0 %120
    %122 = vrot.lane.b32.xlu0 %v104, 19
    %v123 = vpop.permute.xlu0 %122
    %124 = vrot.lane.b32.xlu0 %v105, 19
    %v125 = vpop.permute.xlu0 %124
    %126 = vrot.lane.b32.xlu0 %v106, 19
    %v127 = vpop.permute.xlu0 %126
    %128 = vrot.lane.b32.xlu0 %v107, 19
    %v129 = vpop.permute.xlu0 %128
    %130 = vrot.lane.b32.xlu0 %v108, 19
    %v131 = vpop.permute.xlu0 %130
    %132 = vrot.lane.b32.xlu0 %v109, 19
    %v133 = vpop.permute.xlu0 %132
    %vm142 = vcmask 285848
    %143 = vst.msk [vmem:[#allocation2 + $0x1] sm:$0xff] %vm142, %v119
    %144 = vst.msk [vmem:[#allocation2 + $0x9] sm:$0xff] %vm142, %v121
    %145 = vst.msk [vmem:[#allocation2 + $0x19] sm:$0xff] %vm142, %v123
    %146 = vst.msk [vmem:[#allocation2 + $0x21] sm:$0xff] %vm142, %v125
    %147 = vst.msk [vmem:[#allocation2 + $0x31] sm:$0xff] %vm142, %v127
    %148 = vst.msk [vmem:[#allocation2 + $0x39] sm:$0xff] %vm142, %v129
    %149 = vst.msk [vmem:[#allocation2 + $0x49] sm:$0xff] %vm142, %v131
    %150 = vst.msk [vmem:[#allocation2 + $0x51] sm:$0xff] %vm142, %v133
    %v151 = vld [vmem:[#allocation2] sm:$0xff]
    %v152 = vld [vmem:[#allocation2 + $0x8] sm:$0xff]
    %v153 = vld [vmem:[#allocation2 + $0x10] sm:$0x3]
    %s154 = sld [smem:[#allocation6]]
    %v155 = vstv %s154
    %v156 = vmul.f32 %v151, %v155
    %v157 = vmul.f32 %v152, %v155
    %v158 = vadd.f32 %v156, 0.0
    %v159 = vadd.f32 %v157, 0.0
    %s160 = sld [smem:[#allocation6 + $0x3]]
    %v161 = vstv %s160
    %v162 = vmul.f32 %v151, %v161
    %v163 = vmul.f32 %v152, %v161
    %v164 = vmul.f32 %v153, %v161
    %vm168 = vcmask 1046528
    %v169 = vrot.slane %v162, 1
    %v170 = vrot.slane %v163, 1
    %v171 = vsel %vm168, %v169, %v170
    %v172 = vrot.slane %v164, 1
    %v173 = vsel %vm168, %v170, %v172
    %v176 = vadd.f32 %v158, %v171
    %v177 = vadd.f32 %v159, %v173
    %s178 = sld [smem:[#allocation6 + $0x6]]
    %v179 = vstv %s178
    %v180 = vmul.f32 %v151, %v179
    %v181 = vmul.f32 %v152, %v179
    %v182 = vmul.f32 %v153, %v179
    %vm186 = vcmask 1045504
    %v187 = vrot.slane %v180, 2
    %v188 = vrot.slane %v181, 2
    %v189 = vsel %vm186, %v187, %v188
    %v190 = vrot.slane %v182, 2
    %v191 = vsel %vm186, %v188, %v190
    %v194 = vadd.f32 %v176, %v189
    %v195 = vadd.f32 %v177, %v191
    %s196 = sld [smem:[#allocation6 + $0x1]]
    %v197 = vstv %s196
    %v198 = vmul.f32 %v151, %v197
    %v199 = vmul.f32 %v152, %v197
    %v200 = vadd.f32 %v198, 0.0
    %v201 = vadd.f32 %v199, 0.0
    %s202 = sld [smem:[#allocation6 + $0x4]]
    %v203 = vstv %s202
    %v204 = vmul.f32 %v151, %v203
    %v205 = vmul.f32 %v152, %v203
    %v206 = vmul.f32 %v153, %v203
    %v210 = vrot.slane %v204, 1
    %v211 = vrot.slane %v205, 1
    %v212 = vsel %vm168, %v210, %v211
    %v213 = vrot.slane %v206, 1
    %v214 = vsel %vm168, %v211, %v213
    %v217 = vadd.f32 %v200, %v212
    %v218 = vadd.f32 %v201, %v214
    %s219 = sld [smem:[#allocation6 + $0x7]]
    %v220 = vstv %s219
    %v221 = vmul.f32 %v151, %v220
    %v222 = vmul.f32 %v152, %v220
    %v223 = vmul.f32 %v153, %v220
    %v227 = vrot.slane %v221, 2
    %v228 = vrot.slane %v222, 2
    %v229 = vsel %vm186, %v227, %v228
    %v230 = vrot.slane %v223, 2
    %v231 = vsel %vm186, %v228, %v230
    %v234 = vadd.f32 %v217, %v229
    %v235 = vadd.f32 %v218, %v231
    %s236 = sld [smem:[#allocation6 + $0x2]]
    %v237 = vstv %s236
    %v238 = vmul.f32 %v151, %v237
    %v239 = vmul.f32 %v152, %v237
    %v240 = vadd.f32 %v238, 0.0
    %v241 = vadd.f32 %v239, 0.0
    %s242 = sld [smem:[#allocation6 + $0x5]]
    %v243 = vstv %s242
    %v244 = vmul.f32 %v151, %v243
    %v245 = vmul.f32 %v152, %v243
    %v246 = vmul.f32 %v153, %v243
    %v250 = vrot.slane %v244, 1
    %v251 = vrot.slane %v245, 1
    %v252 = vsel %vm168, %v250, %v251
    %v253 = vrot.slane %v246, 1
    %v254 = vsel %vm168, %v251, %v253
    %v257 = vadd.f32 %v240, %v252
    %v258 = vadd.f32 %v241, %v254
    %s259 = sld [smem:[#allocation6 + $0x8]]
    %v260 = vstv %s259
    %v261 = vmul.f32 %v151, %v260
    %v262 = vmul.f32 %v152, %v260
    %v263 = vmul.f32 %v153, %v260
    %v267 = vrot.slane %v261, 2
    %v268 = vrot.slane %v262, 2
    %v269 = vsel %vm186, %v267, %v268
    %v270 = vrot.slane %v263, 2
    %v271 = vsel %vm186, %v268, %v270
    %v274 = vadd.f32 %v257, %v269
    %v275 = vadd.f32 %v258, %v271
    %s276 = scalar_lea.vmem [#allocation2], 24
    %v277 = vld [vmem:[%s276] sm:$0xff]
    %v278 = vld [vmem:[%s276 + $0x8] sm:$0xff]
    %v279 = vld [vmem:[%s276 + $0x10] sm:$0x3]
    %s280 = sld [smem:[#allocation6 + $0x9]]
    %v281 = vstv %s280
    %v282 = vmul.f32 %v277, %v281
    %v283 = vmul.f32 %v278, %v281
    %v284 = vadd.f32 %v194, %v282
    %v285 = vadd.f32 %v195, %v283
    %s286 = sld [smem:[#allocation6 + $0xc]]
    %v287 = vstv %s286
    %v288 = vmul.f32 %v277, %v287
    %v289 = vmul.f32 %v278, %v287
    %v290 = vmul.f32 %v279, %v287
    %v294 = vrot.slane %v288, 1
    %v295 = vrot.slane %v289, 1
    %v296 = vsel %vm168, %v294, %v295
    %v297 = vrot.slane %v290, 1
    %v298 = vsel %vm168, %v295, %v297
    %v301 = vadd.f32 %v284, %v296
    %v302 = vadd.f32 %v285, %v298
    %s303 = sld [smem:[#allocation6 + $0xf]]
    %v304 = vstv %s303
    %v305 = vmul.f32 %v277, %v304
    %v306 = vmul.f32 %v278, %v304
    %v307 = vmul.f32 %v279, %v304
    %v311 = vrot.slane %v305, 2
    %v312 = vrot.slane %v306, 2
    %v313 = vsel %vm186, %v311, %v312
    %v314 = vrot.slane %v307, 2
    %v315 = vsel %vm186, %v312, %v314
    %v318 = vadd.f32 %v301, %v313
    %v319 = vadd.f32 %v302, %v315
    %s320 = sld [smem:[#allocation6 + $0xa]]
    %v321 = vstv %s320
    %v322 = vmul.f32 %v277, %v321
    %v323 = vmul.f32 %v278, %v321
    %v324 = vadd.f32 %v234, %v322
    %v325 = vadd.f32 %v235, %v323
    %s326 = sld [smem:[#allocation6 + $0xd]]
    %v327 = vstv %s326
    %v328 = vmul.f32 %v277, %v327
    %v329 = vmul.f32 %v278, %v327
    %v330 = vmul.f32 %v279, %v327
    %v334 = vrot.slane %v328, 1
    %v335 = vrot.slane %v329, 1
    %v336 = vsel %vm168, %v334, %v335
    %v337 = vrot.slane %v330, 1
    %v338 = vsel %vm168, %v335, %v337
    %v341 = vadd.f32 %v324, %v336
    %v342 = vadd.f32 %v325, %v338
    %s343 = sld [smem:[#allocation6 + $0x10]]
    %v344 = vstv %s343
    %v345 = vmul.f32 %v277, %v344
    %v346 = vmul.f32 %v278, %v344
    %v347 = vmul.f32 %v279, %v344
    %v351 = vrot.slane %v345, 2
    %v352 = vrot.slane %v346, 2
    %v353 = vsel %vm186, %v351, %v352
    %v354 = vrot.slane %v347, 2
    %v355 = vsel %vm186, %v352, %v354
    %v358 = vadd.f32 %v341, %v353
    %v359 = vadd.f32 %v342, %v355
    %s360 = sld [smem:[#allocation6 + $0xb]]
    %v361 = vstv %s360
    %v362 = vmul.f32 %v277, %v361
    %v363 = vmul.f32 %v278, %v361
    %v364 = vadd.f32 %v274, %v362
    %v365 = vadd.f32 %v275, %v363
    %s366 = sld [smem:[#allocation6 + $0xe]]
    %v367 = vstv %s366
    %v368 = vmul.f32 %v277, %v367
    %v369 = vmul.f32 %v278, %v367
    %v370 = vmul.f32 %v279, %v367
    %v374 = vrot.slane %v368, 1
    %v375 = vrot.slane %v369, 1
    %v376 = vsel %vm168, %v374, %v375
    %v377 = vrot.slane %v370, 1
    %v378 = vsel %vm168, %v375, %v377
    %v381 = vadd.f32 %v364, %v376
    %v382 = vadd.f32 %v365, %v378
    %s383 = sld [smem:[#allocation6 + $0x11]]
    %v384 = vstv %s383
    %v385 = vmul.f32 %v277, %v384
    %v386 = vmul.f32 %v278, %v384
    %v387 = vmul.f32 %v279, %v384
    %v391 = vrot.slane %v385, 2
    %v392 = vrot.slane %v386, 2
    %v393 = vsel %vm186, %v391, %v392
    %v394 = vrot.slane %v387, 2
    %v395 = vsel %vm186, %v392, %v394
    %v398 = vadd.f32 %v381, %v393
    %v399 = vadd.f32 %v382, %v395
    %s400 = scalar_lea.vmem [#allocation2], 48
    %v401 = vld [vmem:[%s400] sm:$0xff]
    %v402 = vld [vmem:[%s400 + $0x8] sm:$0xff]
    %v403 = vld [vmem:[%s400 + $0x10] sm:$0x3]
    %s404 = sld [smem:[#allocation6 + $0x12]]
    %v405 = vstv %s404
    %v406 = vmul.f32 %v401, %v405
    %v407 = vmul.f32 %v402, %v405
    %v408 = vadd.f32 %v318, %v406
    %v409 = vadd.f32 %v319, %v407
    %s410 = sld [smem:[#allocation6 + $0x15]]
    %v411 = vstv %s410
    %v412 = vmul.f32 %v401, %v411
    %v413 = vmul.f32 %v402, %v411
    %v414 = vmul.f32 %v403, %v411
    %v418 = vrot.slane %v412, 1
    %v419 = vrot.slane %v413, 1
    %v420 = vsel %vm168, %v418, %v419
    %v421 = vrot.slane %v414, 1
    %v422 = vsel %vm168, %v419, %v421
    %v425 = vadd.f32 %v408, %v420
    %v426 = vadd.f32 %v409, %v422
    %s427 = sld [smem:[#allocation6 + $0x18]]
    %v428 = vstv %s427
    %v429 = vmul.f32 %v401, %v428
    %v430 = vmul.f32 %v402, %v428
    %v431 = vmul.f32 %v403, %v428
    %v435 = vrot.slane %v429, 2
    %v436 = vrot.slane %v430, 2
    %v437 = vsel %vm186, %v435, %v436
    %v438 = vrot.slane %v431, 2
    %v439 = vsel %vm186, %v436, %v438
    %v442 = vadd.f32 %v425, %v437
    %v443 = vadd.f32 %v426, %v439
    %s444 = sld [smem:[#allocation6 + $0x13]]
    %v445 = vstv %s444
    %v446 = vmul.f32 %v401, %v445
    %v447 = vmul.f32 %v402, %v445
    %v448 = vadd.f32 %v358, %v446
    %v449 = vadd.f32 %v359, %v447
    %s450 = sld [smem:[#allocation6 + $0x16]]
    %v451 = vstv %s450
    %v452 = vmul.f32 %v401, %v451
    %v453 = vmul.f32 %v402, %v451
    %v454 = vmul.f32 %v403, %v451
    %v458 = vrot.slane %v452, 1
    %v459 = vrot.slane %v453, 1
    %v460 = vsel %vm168, %v458, %v459
    %v461 = vrot.slane %v454, 1
    %v462 = vsel %vm168, %v459, %v461
    %v465 = vadd.f32 %v448, %v460
    %v466 = vadd.f32 %v449, %v462
    %s467 = sld [smem:[#allocation6 + $0x19]]
    %v468 = vstv %s467
    %v469 = vmul.f32 %v401, %v468
    %v470 = vmul.f32 %v402, %v468
    %v471 = vmul.f32 %v403, %v468
    %v475 = vrot.slane %v469, 2
    %v476 = vrot.slane %v470, 2
    %v477 = vsel %vm186, %v475, %v476
    %v478 = vrot.slane %v471, 2
    %v479 = vsel %vm186, %v476, %v478
    %v482 = vadd.f32 %v465, %v477
    %v483 = vadd.f32 %v466, %v479
    %s484 = sld [smem:[#allocation6 + $0x14]]
    %v485 = vstv %s484
    %v486 = vmul.f32 %v401, %v485
    %v487 = vmul.f32 %v402, %v485
    %v488 = vadd.f32 %v398, %v486
    %v489 = vadd.f32 %v399, %v487
    %s490 = sld [smem:[#allocation6 + $0x17]]
    %v491 = vstv %s490
    %v492 = vmul.f32 %v401, %v491
    %v493 = vmul.f32 %v402, %v491
    %v494 = vmul.f32 %v403, %v491
    %v498 = vrot.slane %v492, 1
    %v499 = vrot.slane %v493, 1
    %v500 = vsel %vm168, %v498, %v499
    %v501 = vrot.slane %v494, 1
    %v502 = vsel %vm168, %v499, %v501
    %v505 = vadd.f32 %v488, %v500
    %v506 = vadd.f32 %v489, %v502
    %s507 = sld [smem:[#allocation6 + $0x1a]]
    %v508 = vstv %s507
    %v509 = vmul.f32 %v401, %v508
    %v510 = vmul.f32 %v402, %v508
    %v511 = vmul.f32 %v403, %v508
    %v515 = vrot.slane %v509, 2
    %v516 = vrot.slane %v510, 2
    %v517 = vsel %vm186, %v515, %v516
    %v518 = vrot.slane %v511, 2
    %v519 = vsel %vm186, %v516, %v518
    %v522 = vadd.f32 %v505, %v517
    %v523 = vadd.f32 %v506, %v519
    %s524 = scalar_lea.vmem [#allocation2], 72
    %v525 = vld [vmem:[%s524] sm:$0xff]
    %v526 = vld [vmem:[%s524 + $0x8] sm:$0xff]
    %v527 = vld [vmem:[%s524 + $0x10] sm:$0x3]
    %s528 = sld [smem:[#allocation6 + $0x1b]]
    %v529 = vstv %s528
    %v530 = vmul.f32 %v525, %v529
    %v531 = vmul.f32 %v526, %v529
    %v532 = vadd.f32 %v442, %v530
    %v533 = vadd.f32 %v443, %v531
    %s534 = sld [smem:[#allocation6 + $0x1e]]
    %v535 = vstv %s534
    %v536 = vmul.f32 %v525, %v535
    %v537 = vmul.f32 %v526, %v535
    %v538 = vmul.f32 %v527, %v535
    %v542 = vrot.slane %v536, 1
    %v543 = vrot.slane %v537, 1
    %v544 = vsel %vm168, %v542, %v543
    %v545 = vrot.slane %v538, 1
    %v546 = vsel %vm168, %v543, %v545
    %v549 = vadd.f32 %v532, %v544
    %v550 = vadd.f32 %v533, %v546
    %s551 = sld [smem:[#allocation6 + $0x21]]
    %v552 = vstv %s551
    %v553 = vmul.f32 %v525, %v552
    %v554 = vmul.f32 %v526, %v552
    %v555 = vmul.f32 %v527, %v552
    %v559 = vrot.slane %v553, 2
    %v560 = vrot.slane %v554, 2
    %v561 = vsel %vm186, %v559, %v560
    %v562 = vrot.slane %v555, 2
    %v563 = vsel %vm186, %v560, %v562
    %v566 = vadd.f32 %v549, %v561
    %v567 = vadd.f32 %v550, %v563
    %s568 = sld [smem:[#allocation6 + $0x1c]]
    %v569 = vstv %s568
    %v570 = vmul.f32 %v525, %v569
    %v571 = vmul.f32 %v526, %v569
    %v572 = vadd.f32 %v482, %v570
    %v573 = vadd.f32 %v483, %v571
    %s574 = sld [smem:[#allocation6 + $0x1f]]
    %v575 = vstv %s574
    %v576 = vmul.f32 %v525, %v575
    %v577 = vmul.f32 %v526, %v575
    %v578 = vmul.f32 %v527, %v575
    %v582 = vrot.slane %v576, 1
    %v583 = vrot.slane %v577, 1
    %v584 = vsel %vm168, %v582, %v583
    %v585 = vrot.slane %v578, 1
    %v586 = vsel %vm168, %v583, %v585
    %v589 = vadd.f32 %v572, %v584
    %v590 = vadd.f32 %v573, %v586
    %s591 = sld [smem:[#allocation6 + $0x22]]
    %v592 = vstv %s591
    %v593 = vmul.f32 %v525, %v592
    %v594 = vmul.f32 %v526, %v592
    %v595 = vmul.f32 %v527, %v592
    %v599 = vrot.slane %v593, 2
    %v600 = vrot.slane %v594, 2
    %v601 = vsel %vm186, %v599, %v600
    %v602 = vrot.slane %v595, 2
    %v603 = vsel %vm186, %v600, %v602
    %v606 = vadd.f32 %v589, %v601
    %v607 = vadd.f32 %v590, %v603
    %s608 = sld [smem:[#allocation6 + $0x1d]]
    %v609 = vstv %s608
    %v610 = vmul.f32 %v525, %v609
    %v611 = vmul.f32 %v526, %v609
    %v612 = vadd.f32 %v522, %v610
    %v613 = vadd.f32 %v523, %v611
    %s614 = sld [smem:[#allocation6 + $0x20]]
    %v615 = vstv %s614
    %v616 = vmul.f32 %v525, %v615
    %v617 = vmul.f32 %v526, %v615
    %v618 = vmul.f32 %v527, %v615
    %v622 = vrot.slane %v616, 1
    %v623 = vrot.slane %v617, 1
    %v624 = vsel %vm168, %v622, %v623
    %v625 = vrot.slane %v618, 1
    %v626 = vsel %vm168, %v623, %v625
    %v629 = vadd.f32 %v612, %v624
    %v630 = vadd.f32 %v613, %v626
    %s631 = sld [smem:[#allocation6 + $0x23]]
    %v632 = vstv %s631
    %v633 = vmul.f32 %v525, %v632
    %v634 = vmul.f32 %v526, %v632
    %v635 = vmul.f32 %v527, %v632
    %v639 = vrot.slane %v633, 2
    %v640 = vrot.slane %v634, 2
    %v641 = vsel %vm186, %v639, %v640
    %v642 = vrot.slane %v635, 2
    %v643 = vsel %vm186, %v640, %v642
    %v646 = vadd.f32 %v629, %v641
    %v647 = vadd.f32 %v630, %v643
    %650 = vrot.lane.b32.xlu0 %v606, 127
    %v651 = vpop.permute.xlu0 %650
    %652 = vrot.lane.b32.xlu0 %v607, 127
    %v653 = vpop.permute.xlu0 %652
    %v656 = vadd.f32 %v566, %v651
    %v657 = vadd.f32 %v567, %v653
    %660 = vrot.lane.b32.xlu0 %v646, 126
    %v661 = vpop.permute.xlu0 %660
    %662 = vrot.lane.b32.xlu0 %v647, 126
    %v663 = vpop.permute.xlu0 %662
    %v666 = vadd.f32 %v656, %v661
    %v667 = vadd.f32 %v657, %v663
    %v668 = vsub.f32 0.0, %v666
    %v669 = vsub.f32 0.0, %v667
    %v670 = vmul.f32 %v668, 1.442695
    %v671 = vpow.pop %v670
    %v672 = vmul.f32 %v669, 1.442695
    %v673 = vpow.pop %v672
    %v674 = vadd.f32 %v671, 1.0
    %v675 = vadd.f32 %v673, 1.0
    %v676 = vrcp.pop %v674
    %v677 = vrcp.pop %v675
    %vm678 = vcmask 293888
    %679 = vst.msk [vmem:[%s2] sm:$0xff] %vm678, %v676
    %680 = vst.msk [vmem:[%s2 + $0x8] sm:$0xff] %vm678, %v677
    // Predicated region
    $region18: #{get_mask_forward.1} parent=1 // pred_check
      _
    $region19: #{get_mask_forward.1} parent=1 // pred_check_branch
      %682 = sbr.rel (0) target = $region21
    $region20: #{get_mask_forward.1} parent=1 // pred_region
      _
    $region21: #{get_mask_forward.1} parent=1 // pred_fallthru
      _
    // Predicated region
    $region22: #{get_mask_forward.1} parent=1 // pred_check
      _
    $region23: #{get_mask_forward.1} parent=1 // pred_check_branch
      %684 = sbr.rel (0) target = $region25
    $region24: #{get_mask_forward.1} parent=1 // pred_region
      _
    $region25: #{get_mask_forward.1} parent=1 // pred_fallthru
      _
    %685 = vsyncpa [#allocation4], 1
    %686 = vsyncpa [#allocation5], 1

</llo_original>
